<compile_context>
chip_gen: v7x
topology: tpu7x:2x2x1
jax: 0.10.0
libtpu: 0.0.40
codegen_flags: <defaults>
</compile_context>

<pallas_src>
import jax
import jax.numpy as jnp
from jax.experimental import pallas as pl
from jax.experimental.pallas import tpu as pltpu


# --------------------------------------------------------------------------
# helpers
# --------------------------------------------------------------------------
def _chunk_rows(c_in, itemsize):
    """Rows (of 128 lanes) processed per inner-loop step on the VPU path.

    Sized so the per-chunk x working set stays ~<= 32 vregs (no spills) while
    each chunk still carries enough work to amortize loop overhead."""
    q = 8 if itemsize >= 4 else (16 if itemsize == 2 else 32)   # sublane quantum
    cap = (256 // max(c_in, 1)) // q * q
    return max(q, min(32, cap))


def _pick_row_tile(n_batch, n_rows, c_in, c_out, itemsize, chunk):
    """Rows-of-128-lanes per grid step for the VPU path."""
    bytes_per_row = (c_in + c_out) * 128 * itemsize            # in + out HBM bytes
    # ~4 MiB of HBM traffic per step amortizes the ~0.35us fixed step overhead.
    target = max(chunk, ((4 << 20) // bytes_per_row) // chunk * chunk)
    # in + out blocks are double-buffered; keep <= ~16 MiB (safe inside v7x's
    # 64 MiB VMEM and far inside v5e/v6e's 128 MiB).
    vmem_cap = max(chunk, ((16 << 20) // (2 * bytes_per_row)) // chunk * chunk)
    rt = min(target, vmem_cap)
    # Keep >= ~8 grid steps so both v7x TensorCores (and the DMA pipeline)
    # always have work; v5e/v6e (1 TC) are unaffected.
    while n_batch * pl.cdiv(n_rows, rt) < 8 and rt > chunk:
        new_rt = max(chunk, (rt // 2) // chunk * chunk)
        if new_rt == rt:
            break
        rt = new_rt
    return min(rt, n_rows)


def _pick_lane_tile(n_batch, n_lanes, c_in, c_out, itemsize):
    """Spatial lanes per grid step for the MXU path."""
    bytes_per_lane = (c_in + c_out) * itemsize
    target = max(128, ((4 << 20) // bytes_per_lane) // 128 * 128)
    vmem_cap = max(128, ((16 << 20) // (2 * bytes_per_lane)) // 128 * 128)
    ts = min(target, vmem_cap)
    while n_batch * pl.cdiv(n_lanes, ts) < 8 and ts > 128:
        new_ts = max(128, (ts // 2) // 128 * 128)
        if new_ts == ts:
            break
        ts = new_ts
    return n_lanes if ts >= n_lanes else ts


# --------------------------------------------------------------------------
# kernels
# --------------------------------------------------------------------------
def _conv1x1x1_tanh_vpu_kernel(w_ref, b_ref, x_ref, o_ref):
    """Small/medium-channel path: unrolled broadcast FMAs on the VPU.

    w_ref: SMEM (C_out*C_in,) f32   b_ref: SMEM (C_out,) f32
    x_ref: VMEM (C_in, RT, 128)     o_ref: VMEM (C_out, RT, 128)
    """
    c_in, rows, _ = x_ref.shape
    c_out = o_ref.shape[0]
    itemsize = jnp.dtype(x_ref.dtype).itemsize
    chunk = _chunk_rows(c_in, itemsize)

    def do_rows(r0, nrows):
        x = x_ref[:, pl.ds(r0, nrows), :].astype(jnp.float32)   # (C_in, nrows, 128)
        for co in range(c_out):
            # fold the bias into the accumulator init (one fewer VALU op/elem)
            acc = b_ref[co] + w_ref[co * c_in] * x[0]
            for ci in range(1, c_in):
                acc = acc + w_ref[co * c_in + ci] * x[ci]
            o_ref[co, pl.ds(r0, nrows), :] = jnp.tanh(acc).astype(o_ref.dtype)

    n_full = rows // chunk
    if n_full > 0:
        @pl.loop(0, n_full)
        def _(j):
            do_rows(pl.multiple_of(j * chunk, chunk), chunk)
    rem = rows - n_full * chunk
    if rem:
        do_rows(n_full * chunk, rem)


def _conv1x1x1_tanh_mxu_kernel(w_ref, b_ref, x_ref, o_ref):
    """Large-channel path: (C_out, C_in) @ (C_in, lanes) on the MXU.

    w_ref: VMEM (C_out, C_in)       b_ref: VMEM (C_out, 1) f32
    x_ref: VMEM (C_in, TS)          o_ref: VMEM (C_out, TS)
    """
    ts = x_ref.shape[1]
    c_out = o_ref.shape[0]
    # keep the (C_out, CH) f32 accumulator to a modest number of vregs
    ch = max(128, min(2048, ((32 * 1024) // max(c_out, 1)) // 128 * 128))
    w = w_ref[...]
    b = b_ref[...].astype(jnp.float32)

    def do_lanes(start, width):
        xc = x_ref[:, pl.ds(start, width)]
        acc = jnp.dot(w, xc, preferred_element_type=jnp.float32)
        o_ref[:, pl.ds(start, width)] = jnp.tanh(acc + b).astype(o_ref.dtype)

    n_full = ts // ch
    if n_full > 0:
        @pl.loop(0, n_full)
        def _(j):
            do_lanes(pl.multiple_of(j * ch, ch), ch)
    rem = ts - n_full * ch
    if rem:
        do_lanes(n_full * ch, rem)


# --------------------------------------------------------------------------
# wrapper
# --------------------------------------------------------------------------
def convlutioanl_out(x_ncdhw, weight, bias):
    """x: (N, C_in, D, H, W); weight: (C_out, C_in); bias: (C_out,).
    Returns tanh(conv1x1x1(x)) as (N, C_out, D, H, W) in x's dtype."""
    N, C_in, D, H, W = x_ncdhw.shape
    C_out = weight.shape[0]
    S = D * H * W
    out_dtype = x_ncdhw.dtype
    itemsize = jnp.dtype(out_dtype).itemsize
    x3 = x_ncdhw.reshape(N, C_in, S)

    compiler_params = pltpu.CompilerParams(
        dimension_semantics=("parallel", "parallel"),
        vmem_limit_bytes=48 * 1024 * 1024,
    )

    use_vpu = (C_in * C_out <= 512) and (C_in <= 16)

    if use_vpu:
        # sublane-dense layout: (N, C_in, R, 128) with R = ceil(S/128)
        S128 = pl.cdiv(S, 128) * 128
        if S128 != S:                      # minimal pad (<128 lanes), negligible
            x3 = jnp.pad(x3, ((0, 0), (0, 0), (0, S128 - S)))
        R = S128 // 128
        chunk = _chunk_rows(C_in, itemsize)
        rt = _pick_row_tile(N, R, C_in, C_out, itemsize, chunk)
        x4 = x3.reshape(N, C_in, R, 128)
        grid = (N, pl.cdiv(R, rt))

        out4 = pl.pallas_call(
            _conv1x1x1_tanh_vpu_kernel,
            out_shape=jax.ShapeDtypeStruct((N, C_out, R, 128), out_dtype),
            grid_spec=pltpu.PrefetchScalarGridSpec(
                num_scalar_prefetch=0,
                grid=grid,
                in_specs=[
                    pl.BlockSpec(memory_space=pltpu.MemorySpace.SMEM),   # weights
                    pl.BlockSpec(memory_space=pltpu.MemorySpace.SMEM),   # bias
                    pl.BlockSpec((None, C_in, rt, 128), lambda n, s: (n, 0, s, 0)),
                ],
                out_specs=pl.BlockSpec((None, C_out, rt, 128),
                                       lambda n, s: (n, 0, s, 0)),
            ),
            compiler_params=compiler_params,
        )(weight.astype(jnp.float32).reshape(-1), bias.astype(jnp.float32), x4)

        out3 = out4.reshape(N, C_out, S128)
        if S128 != S:
            out3 = out3[:, :, :S]
    else:
        # MXU path: (C_in, lanes) blocks already sublane-dense for C_in >= 8.
        ts = _pick_lane_tile(N, S, C_in, C_out, itemsize)
        grid = (N, pl.cdiv(S, ts))
        w_dt = jnp.bfloat16 if out_dtype == jnp.bfloat16 else jnp.float32

        out3 = pl.pallas_call(
            _conv1x1x1_tanh_mxu_kernel,
            out_shape=jax.ShapeDtypeStruct((N, C_out, S), out_dtype),
            grid_spec=pltpu.PrefetchScalarGridSpec(
                num_scalar_prefetch=0,
                grid=grid,
                in_specs=[
                    pl.BlockSpec((C_out, C_in), lambda n, s: (0, 0)),
                    pl.BlockSpec((C_out, 1), lambda n, s: (0, 0)),
                    pl.BlockSpec((None, C_in, ts), lambda n, s: (n, 0, s)),
                ],
                out_specs=pl.BlockSpec((None, C_out, ts), lambda n, s: (n, 0, s)),
            ),
            compiler_params=compiler_params,
        )(weight.astype(w_dt), bias.astype(jnp.float32).reshape(C_out, 1), x3)

    return out3.reshape(N, C_out, D, H, W)


# --------------------------------------------------------------------------
# self-test
# --------------------------------------------------------------------------
if __name__ == "__main__":
    key = jax.random.PRNGKey(0)
    k_x, k_w, k_b = jax.random.split(key, 3)

    def ref_fn(x, w, b):
        y = jnp.einsum("ncdhw,oc->nodhw", x, w,
                       precision=jax.lax.Precision.HIGHEST)
        return jnp.tanh(y + b[None, :, None, None, None])

    # main case: Conv3d input (N, C_in, D, H, W), 1x1x1 kernel
    N, C_in, C_out, D, H, W = 2, 4, 2, 4, 8, 8
    x = jax.random.normal(k_x, (N, C_in, D, H, W), dtype=jnp.float32)
    weight = jax.random.normal(k_w, (C_out, C_in), dtype=jnp.float32) * 0.1
    bias = jax.random.normal(k_b, (C_out,), dtype=jnp.float32) * 0.1

    out = jax.block_until_ready(convlutioanl_out(x, weight, bias))
    assert out.shape == (N, C_out, D, H, W)
    assert jnp.allclose(out, ref_fn(x, weight, bias), atol=1e-5), "VPU path mismatch"

    # ragged spatial size (exercises pad-to-128 + slice path)
    x2 = jax.random.normal(k_x, (1, 3, 3, 5, 7), dtype=jnp.float32)
    w2 = jax.random.normal(k_w, (5, 3), dtype=jnp.float32) * 0.1
    b2 = jax.random.normal(k_b, (5,), dtype=jnp.float32) * 0.1
    out2 = jax.block_until_ready(convlutioanl_out(x2, w2, b2))
    assert jnp.allclose(out2, ref_fn(x2, w2, b2), atol=1e-5), "ragged path mismatch"

    # larger channel count (exercises the MXU path); loose tol because the MXU
    # may use fewer f32-emulation passes than the HIGHEST-precision reference.
    x3 = jax.random.normal(k_x, (1, 24, 4, 8, 8), dtype=jnp.float32)
    w3 = jax.random.normal(k_w, (24, 24), dtype=jnp.float32) * 0.1
    b3 = jax.random.normal(k_b, (24,), dtype=jnp.float32) * 0.1
    out3 = jax.block_until_ready(convlutioanl_out(x3, w3, b3))
    assert jnp.allclose(out3, ref_fn(x3, w3, b3), atol=1e-2), "MXU path mismatch"

    print("KERNEL_OK")
</pallas_src>

<mosaic_0001>
module attributes {stable_mosaic.version = 11 : i64} {
  func.func @_conv1x1x1_tanh_vpu_kernel(%arg0: i32, %arg1: i32, %arg2: memref<8xf32, #tpu.memory_space<smem>>, %arg3: memref<2xf32, #tpu.memory_space<smem>>, %arg4: memref<1x4x2x128xf32, #tpu.memory_space<vmem>>, %arg5: memref<1x2x2x128xf32, #tpu.memory_space<vmem>>) attributes {dimension_semantics = [#tpu.dimension_semantics<parallel>, #tpu.dimension_semantics<parallel>], iteration_bounds = array<i64: 2, 1>, scalar_prefetch = 0 : i64, scratch_operands = 0 : i64, tpu.core_type = #tpu.core_type<tc>, window_params = [{transform_indices = @transform_0, window_bounds = array<i64: 8>}, {transform_indices = @transform_1, window_bounds = array<i64: 2>}, {transform_indices = @transform_2, window_bounds = array<i64: 1, 4, 2, 128>}, {transform_indices = @transform_3, window_bounds = array<i64: 1, 2, 2, 128>}]} {
    %c0 = arith.constant 0 : index
    %c0_0 = arith.constant 0 : index
    %c0_1 = arith.constant 0 : index
    %c0_2 = arith.constant 0 : index
    %0 = vector.load %arg4[%c0, %c0_0, %c0_1, %c0_2] : memref<1x4x2x128xf32, #tpu.memory_space<vmem>>, vector<1x4x2x128xf32>
    %1 = vector.shape_cast %0 : vector<1x4x2x128xf32> to vector<4x2x128xf32>
    %c0_3 = arith.constant 0 : index
    %2 = memref.load %arg3[%c0_3] : memref<2xf32, #tpu.memory_space<smem>>
    %c0_4 = arith.constant 0 : index
    %3 = memref.load %arg2[%c0_4] : memref<8xf32, #tpu.memory_space<smem>>
    %4 = vector.extract_strided_slice %1 {offsets = [0, 0, 0], sizes = [1, 2, 128], strides = [1, 1, 1]} : vector<4x2x128xf32> to vector<1x2x128xf32>
    %5 = vector.shape_cast %4 : vector<1x2x128xf32> to vector<2x128xf32>
    %6 = vector.broadcast %3 : f32 to vector<2x128xf32>
    %7 = arith.mulf %6, %5 : vector<2x128xf32>
    %8 = vector.broadcast %2 : f32 to vector<2x128xf32>
    %9 = arith.addf %8, %7 : vector<2x128xf32>
    %c1 = arith.constant 1 : index
    %10 = memref.load %arg2[%c1] : memref<8xf32, #tpu.memory_space<smem>>
    %11 = vector.extract_strided_slice %1 {offsets = [1, 0, 0], sizes = [1, 2, 128], strides = [1, 1, 1]} : vector<4x2x128xf32> to vector<1x2x128xf32>
    %12 = vector.shape_cast %11 : vector<1x2x128xf32> to vector<2x128xf32>
    %13 = vector.broadcast %10 : f32 to vector<2x128xf32>
    %14 = arith.mulf %13, %12 : vector<2x128xf32>
    %15 = arith.addf %9, %14 : vector<2x128xf32>
    %c2 = arith.constant 2 : index
    %16 = memref.load %arg2[%c2] : memref<8xf32, #tpu.memory_space<smem>>
    %17 = vector.extract_strided_slice %1 {offsets = [2, 0, 0], sizes = [1, 2, 128], strides = [1, 1, 1]} : vector<4x2x128xf32> to vector<1x2x128xf32>
    %18 = vector.shape_cast %17 : vector<1x2x128xf32> to vector<2x128xf32>
    %19 = vector.broadcast %16 : f32 to vector<2x128xf32>
    %20 = arith.mulf %19, %18 : vector<2x128xf32>
    %21 = arith.addf %15, %20 : vector<2x128xf32>
    %c3 = arith.constant 3 : index
    %22 = memref.load %arg2[%c3] : memref<8xf32, #tpu.memory_space<smem>>
    %23 = vector.extract_strided_slice %1 {offsets = [3, 0, 0], sizes = [1, 2, 128], strides = [1, 1, 1]} : vector<4x2x128xf32> to vector<1x2x128xf32>
    %24 = vector.shape_cast %23 : vector<1x2x128xf32> to vector<2x128xf32>
    %25 = vector.broadcast %22 : f32 to vector<2x128xf32>
    %26 = arith.mulf %25, %24 : vector<2x128xf32>
    %27 = arith.addf %21, %26 : vector<2x128xf32>
    %28 = math.tanh %27 : vector<2x128xf32>
    %c0_5 = arith.constant 0 : index
    %c0_6 = arith.constant 0 : index
    %c0_7 = arith.constant 0 : index
    %c0_8 = arith.constant 0 : index
    %29 = vector.load %arg5[%c0_5, %c0_6, %c0_7, %c0_8] : memref<1x2x2x128xf32, #tpu.memory_space<vmem>>, vector<1x1x2x128xf32>
    %30 = vector.shape_cast %29 : vector<1x1x2x128xf32> to vector<2x128xf32>
    %31 = vector.shape_cast %28 : vector<2x128xf32> to vector<1x1x2x128xf32>
    tpu.vector_store %arg5[%c0_5, %c0_6, %c0_7, %c0_8], %31 {strides = array<i32>} : memref<1x2x2x128xf32, #tpu.memory_space<vmem>>, vector<1x1x2x128xf32>,
    %c1_9 = arith.constant 1 : index
    %32 = memref.load %arg3[%c1_9] : memref<2xf32, #tpu.memory_space<smem>>
    %c4 = arith.constant 4 : index
    %33 = memref.load %arg2[%c4] : memref<8xf32, #tpu.memory_space<smem>>
    %34 = vector.extract_strided_slice %1 {offsets = [0, 0, 0], sizes = [1, 2, 128], strides = [1, 1, 1]} : vector<4x2x128xf32> to vector<1x2x128xf32>
    %35 = vector.shape_cast %34 : vector<1x2x128xf32> to vector<2x128xf32>
    %36 = vector.broadcast %33 : f32 to vector<2x128xf32>
    %37 = arith.mulf %36, %35 : vector<2x128xf32>
    %38 = vector.broadcast %32 : f32 to vector<2x128xf32>
    %39 = arith.addf %38, %37 : vector<2x128xf32>
    %c5 = arith.constant 5 : index
    %40 = memref.load %arg2[%c5] : memref<8xf32, #tpu.memory_space<smem>>
    %41 = vector.extract_strided_slice %1 {offsets = [1, 0, 0], sizes = [1, 2, 128], strides = [1, 1, 1]} : vector<4x2x128xf32> to vector<1x2x128xf32>
    %42 = vector.shape_cast %41 : vector<1x2x128xf32> to vector<2x128xf32>
    %43 = vector.broadcast %40 : f32 to vector<2x128xf32>
    %44 = arith.mulf %43, %42 : vector<2x128xf32>
    %45 = arith.addf %39, %44 : vector<2x128xf32>
    %c6 = arith.constant 6 : index
    %46 = memref.load %arg2[%c6] : memref<8xf32, #tpu.memory_space<smem>>
    %47 = vector.extract_strided_slice %1 {offsets = [2, 0, 0], sizes = [1, 2, 128], strides = [1, 1, 1]} : vector<4x2x128xf32> to vector<1x2x128xf32>
    %48 = vector.shape_cast %47 : vector<1x2x128xf32> to vector<2x128xf32>
    %49 = vector.broadcast %46 : f32 to vector<2x128xf32>
    %50 = arith.mulf %49, %48 : vector<2x128xf32>
    %51 = arith.addf %45, %50 : vector<2x128xf32>
    %c7 = arith.constant 7 : index
    %52 = memref.load %arg2[%c7] : memref<8xf32, #tpu.memory_space<smem>>
    %53 = vector.extract_strided_slice %1 {offsets = [3, 0, 0], sizes = [1, 2, 128], strides = [1, 1, 1]} : vector<4x2x128xf32> to vector<1x2x128xf32>
    %54 = vector.shape_cast %53 : vector<1x2x128xf32> to vector<2x128xf32>
    %55 = vector.broadcast %52 : f32 to vector<2x128xf32>
    %56 = arith.mulf %55, %54 : vector<2x128xf32>
    %57 = arith.addf %51, %56 : vector<2x128xf32>
    %58 = math.tanh %57 : vector<2x128xf32>
    %c0_10 = arith.constant 0 : index
    %c1_11 = arith.constant 1 : index
    %c0_12 = arith.constant 0 : index
    %c0_13 = arith.constant 0 : index
    %59 = vector.load %arg5[%c0_10, %c1_11, %c0_12, %c0_13] : memref<1x2x2x128xf32, #tpu.memory_space<vmem>>, vector<1x1x2x128xf32>
    %60 = vector.shape_cast %59 : vector<1x1x2x128xf32> to vector<2x128xf32>
    %61 = vector.shape_cast %58 : vector<2x128xf32> to vector<1x1x2x128xf32>
    tpu.vector_store %arg5[%c0_10, %c1_11, %c0_12, %c0_13], %61 {strides = array<i32>} : memref<1x2x2x128xf32, #tpu.memory_space<vmem>>, vector<1x1x2x128xf32>,
    return
  }
  func.func @transform_0(%arg0: i32, %arg1: i32) -> i32 {
    %c0_i32 = arith.constant 0 : i32
    %c0_i32_0 = arith.constant 0 : i32
    return %c0_i32 : i32
  }
  func.func @transform_1(%arg0: i32, %arg1: i32) -> i32 {
    %c0_i32 = arith.constant 0 : i32
    %c0_i32_0 = arith.constant 0 : i32
    return %c0_i32 : i32
  }
  func.func @transform_2(%arg0: i32, %arg1: i32) -> (i32, i32, i32, i32) {
    %c0_i32 = arith.constant 0 : i32
    %c0_i32_0 = arith.constant 0 : i32
    %c0_i32_1 = arith.constant 0 : i32
    return %arg0, %c0_i32, %arg1, %c0_i32_0 : i32, i32, i32, i32
  }
  func.func @transform_3(%arg0: i32, %arg1: i32) -> (i32, i32, i32, i32) {
    %c0_i32 = arith.constant 0 : i32
    %c0_i32_0 = arith.constant 0 : i32
    %c0_i32_1 = arith.constant 0 : i32
    return %arg0, %c0_i32, %arg1, %c0_i32_0 : i32, i32, i32, i32
  }
}

</mosaic_0001>

<llo_original>
// kernel: tpu_custom_call.1
$region0: #{tpu_custom_call.1}
  #allocation0 [shape = 'u32[]', space=smem, size = 0x4, offset = 0x4, fixed_abs, tag = 'smem constant byte address 0x4 - core index']
  #allocation1 [shape = 'u32[144,128]{1,0:T(1,128)}', space=vmem, size = 0x12000, scoped, tag = 'internal scratch']
  %s0 = inlined_call_operand.hbm [shape: f32[8], index: 0, kind: input, shape index: {}]
  %s1 = inlined_call_operand.vmem [shape: f32[2], index: 1, kind: input, shape index: {}]
  %s2 = inlined_call_operand.hbm [shape: f32[2,4,2,128], index: 2, kind: input, shape index: {}]
  %s3 = inlined_call_operand.hbm [shape: f32[2,2,2,128], index: 3, kind: output, shape index: {}]
  %s4 = sld [smem:[#allocation0]]
  $region57: #{tpu_custom_call.1} parent=0
    _
  %s6 = ssub.s32 1, %s4
  %s7 = scalar_select 0, %s6, %s4
  $region1: #{tpu_custom_call.1} parent=0
    #allocation2 [shape = 'u8[512]{0}', space=smem, size = 0x200, scoped, tag = 'input window, operand 0, single buffered']
    #allocation3 [shape = 's32[2]{0}', space=sflag, size = 0x8, scoped, tag = 'scoped memory for tpu_custom_call.1']
    #allocation4 [shape = 's32[2]{0}', space=sflag, size = 0x8, scoped, tag = 'scoped memory for tpu_custom_call.1']
    #allocation5 [shape = 's32[2]{0}', space=sflag, size = 0x8, scoped, tag = 'scoped memory for tpu_custom_call.1']
    #allocation6 [shape = 's32[2]{0}', space=sflag, size = 0x8, scoped, tag = 'scoped memory for tpu_custom_call.1']
    #allocation7 [shape = 'u8[512]{0}', space=smem, size = 0x200, scoped, tag = 'input window, operand 1, single buffered']
    #allocation8 [shape = 'u8[8192]{0}', space=vmem, size = 0x2000, scoped, tag = 'input window, operand 2']
    #allocation9 [shape = 'u8[4096]{0}', space=vmem, size = 0x1000, scoped, tag = 'output window, operand 0']
    %8 = vsyncpa [#allocation5], 0
    %9 = vsyncpa [#allocation6], 0
    %10 = vsyncpa [#allocation3], 0
    %s11 = scalar_lea.sflag [#allocation3], 1
    %12 = vsyncpa %s11, 0
    %13 = vsyncpa [#allocation4], 0
    %s14 = scalar_lea.sflag [#allocation4], 1
    %15 = vsyncpa %s14, 0
    loop: start=0, step=1, limit=4
    $region2: #{tpu_custom_call.1} parent=1 // loop_pre_header
      _
    $region3: #{tpu_custom_call.1} parent=1 // loop_header
      %s17 = sphi 0, %s21
      %p18 = scmp.ge.s32.totalorder %s17, 4
      %s24 = sphi 0, %s36
      %s25 = sphi 0, %s32
      %s26 = sphi 0, %s24
      %s27 = sphi 0, %s25
      %s28 = sphi 0, %s26
      %s29 = sphi 0, %s27
      %s37 = sphi 0, %s37
      %s39 = sphi 0, %s37
      %s40 = sphi 0, %s39
      %s54 = sphi 0, %s40
      %s58 = sphi 0, %s58
      %s60 = sphi 0, %s58
      %s61 = sphi 0, %s60
      %s75 = sphi 0, %s61
      %s83 = sphi 0, %s85
      %s86 = sphi 0, %s83
      %s87 = sphi 0, %s86
      %s103 = sphi 0, %s87
      %s111 = sphi 0, %s113
      %s114 = sphi 0, %s111
      %s115 = sphi 0, %s114
      %s131 = sphi 0, %s115
    $region4: #{tpu_custom_call.1} parent=1 // loop_header_branch
      %20 = sbr.rel (%p18) target = $region8
    $region5: #{tpu_custom_call.1} parent=1 // loop_body
      %s22 = ssub.s32 %s17, 1
      %s23 = ssub.s32 %s17, 2
      %s30 = sadd.s32 1, %s25
      %p31 = scmp.ge.s32.totalorder %s30, 1
      %s32 = scalar_select %p31, 0, %s30
      %s33 = sadd.s32 1, %s24
      %s34 = scalar_select %p31, %s33, %s24
      %p35 = scmp.ge.s32.totalorder %s34, 2
      %s36 = scalar_select %p35, 0, %s34
      %s38 = sadd.s32 %s37, 1
      %p41 = scmp.eq.s32.totalorder %s17, 1
      %p42 = scmp.ne.s32.totalorder %s37, %s39
      %p43 = scmp.eq.s32.totalorder %s17, 0
      %p44 = por %p42, %p43
      %p45 = scmp.ne.s32.totalorder %s37, %s39
      %p46 = scmp.eq.s32.totalorder %s22, 1
      %p47 = por %p45, %p46
      %p48 = scmp.ne.s32.totalorder %s39, %s40
      %p49 = scmp.eq.s32.totalorder %s22, 0
      %p50 = por %p48, %p49
      %p51 = scmp.ne.s32.totalorder %s39, %s40
      %p52 = scmp.eq.s32.totalorder %s23, 1
      %p53 = por %p51, %p52
      %p55 = scmp.ne.s32.totalorder %s40, %s54
      %p56 = scmp.eq.s32.totalorder %s23, 0
      %p57 = por %p55, %p56
      %s59 = sadd.s32 %s58, 1
      %p62 = scmp.eq.s32.totalorder %s17, 1
      %p63 = scmp.ne.s32.totalorder %s58, %s60
      %p64 = scmp.eq.s32.totalorder %s17, 0
      %p65 = por %p63, %p64
      %p66 = scmp.ne.s32.totalorder %s58, %s60
      %p67 = scmp.eq.s32.totalorder %s22, 1
      %p68 = por %p66, %p67
      %p69 = scmp.ne.s32.totalorder %s60, %s61
      %p70 = scmp.eq.s32.totalorder %s22, 0
      %p71 = por %p69, %p70
      %p72 = scmp.ne.s32.totalorder %s60, %s61
      %p73 = scmp.eq.s32.totalorder %s23, 1
      %p74 = por %p72, %p73
      %p76 = scmp.ne.s32.totalorder %s61, %s75
      %p77 = scmp.eq.s32.totalorder %s23, 0
      %p78 = por %p76, %p77
      %s79 = ssub.s32 %s24, %s36
      %s80 = ssub.s32 %s25, %s32
      %s81 = sor.u32 %s79, %s80
      %p82 = scmp.eq.s32.totalorder %s81, 0
      %s84 = sadd.s32 %s83, 1
      %s85 = scalar_select %p82, %s83, %s84
      %p88 = pneg %p82
      %p89 = scmp.eq.s32.totalorder %s17, 1
      %p90 = por %p88, %p89
      %p91 = scmp.ne.s32.totalorder %s83, %s86
      %p92 = scmp.eq.s32.totalorder %s17, 0
      %p93 = por %p91, %p92
      %p94 = scmp.ne.s32.totalorder %s83, %s86
      %p95 = scmp.eq.s32.totalorder %s22, 1
      %p96 = por %p94, %p95
      %p97 = scmp.ne.s32.totalorder %s86, %s87
      %p98 = scmp.eq.s32.totalorder %s22, 0
      %p99 = por %p97, %p98
      %p100 = scmp.ne.s32.totalorder %s86, %s87
      %p101 = scmp.eq.s32.totalorder %s23, 1
      %p102 = por %p100, %p101
      %p104 = scmp.ne.s32.totalorder %s87, %s103
      %p105 = scmp.eq.s32.totalorder %s23, 0
      %p106 = por %p104, %p105
      %s107 = ssub.s32 %s24, %s36
      %s108 = ssub.s32 %s25, %s32
      %s109 = sor.u32 %s107, %s108
      %p110 = scmp.eq.s32.totalorder %s109, 0
      %s112 = sadd.s32 %s111, 1
      %s113 = scalar_select %p110, %s111, %s112
      %p116 = pneg %p110
      %p117 = scmp.eq.s32.totalorder %s17, 1
      %p118 = por %p116, %p117
      %p119 = scmp.ne.s32.totalorder %s111, %s114
      %p120 = scmp.eq.s32.totalorder %s17, 0
      %p121 = por %p119, %p120
      %p122 = scmp.ne.s32.totalorder %s111, %s114
      %p123 = scmp.eq.s32.totalorder %s22, 1
      %p124 = por %p122, %p123
      %p125 = scmp.ne.s32.totalorder %s114, %s115
      %p126 = scmp.eq.s32.totalorder %s22, 0
      %p127 = por %p125, %p126
      %p128 = scmp.ne.s32.totalorder %s114, %s115
      %p129 = scmp.eq.s32.totalorder %s23, 1
      %p130 = por %p128, %p129
      %p132 = scmp.ne.s32.totalorder %s115, %s131
      %p133 = scmp.eq.s32.totalorder %s23, 0
      %p134 = por %p132, %p133
      %p135 = scmp.le.s32.totalorder 1, %s17
      %p136 = scmp.lt.s32.totalorder %s17, 3
      %p137 = pnand %p135, %p136
      %p138 = pneg %p137
      // Predicated region
      $region9: #{tpu_custom_call.1} parent=5 // pred_check
        _
      $region10: #{tpu_custom_call.1} parent=5 // pred_check_branch
        %140 = sbr.rel (%p137) target = $region12
      $region11: #{tpu_custom_call.1} parent=5 // pred_region
        %s141 = ssub.s32 %s17, 1
        // Predicated region
        $region13: #{tpu_custom_call.1} parent=11 // pred_check
          %p142 = pneg %p50
        $region14: #{tpu_custom_call.1} parent=11 // pred_check_branch
          %144 = sbr.rel (%p142) target = $region16
        $region15: #{tpu_custom_call.1} parent=11 // pred_region
          %s146 = ssub.s32 16, 16
          %147 = vsyncadd [#allocation5], %s146
          %150 = dma.hbm_to_smem %s0, 16, [#allocation2], [#allocation5]
        $region16: #{tpu_custom_call.1} parent=11 // pred_fallthru
          _
        // Predicated region
        $region17: #{tpu_custom_call.1} parent=11 // pred_check
          %p151 = pneg %p71
        $region18: #{tpu_custom_call.1} parent=11 // pred_check_branch
          %153 = sbr.rel (%p151) target = $region20
        $region19: #{tpu_custom_call.1} parent=11 // pred_region
          %s155 = ssub.s32 16, 16
          %156 = vsyncadd [#allocation6], %s155
          %s158 = sshll.u32 %s1, 4
          %s159 = int_to_ptr.vmem [resolvable:$true] %s158
          %161 = dma.vmem_to_smem %s159, 16, [#allocation7], [#allocation6]
        $region20: #{tpu_custom_call.1} parent=11 // pred_fallthru
          _
      $region12: #{tpu_custom_call.1} parent=5 // pred_fallthru
        _
      %p162 = scmp.lt.s32.totalorder %s17, 2
      // Predicated region
      $region21: #{tpu_custom_call.1} parent=5 // pred_check
        %p163 = pneg %p162
      $region22: #{tpu_custom_call.1} parent=5 // pred_check_branch
        %165 = sbr.rel (%p163) target = $region24
      $region23: #{tpu_custom_call.1} parent=5 // pred_region
        // Predicated region
        $region25: #{tpu_custom_call.1} parent=23 // pred_check
          %p166 = pneg %p93
        $region26: #{tpu_custom_call.1} parent=23 // pred_check_branch
          %168 = sbr.rel (%p166) target = $region28
        $region27: #{tpu_custom_call.1} parent=23 // pred_region
          %s169 = sand.u32 %s83, 1
          %s170 = scalar_lea.sflag [#allocation3], %s169
          %s171 = sand.u32 %s83, 1
          %s172 = smul.addr %s171, 8
          %s173 = scalar_lea.vmem [#allocation8], %s172
          %s175 = ssub.s32 128, 128
          %176 = vsyncadd %s170, %s175
          %s177 = smul.addr %s24, 4
          %s178 = sadd.s32 %s25, %s177
          %s179 = smul.addr %s178, 32
          %s180 = scalar_lea.hbm %s2, %s179
          %s181 = sshll.u32 %s173, 4
          %s182 = int_to_ptr.vmem [resolvable:$true] %s181
          %187 = dma.hbm_to_vmem [thread:$0]  %s180, 128, %s182, %s170, 32, 32, 2
        $region28: #{tpu_custom_call.1} parent=23 // pred_fallthru
          _
      $region24: #{tpu_custom_call.1} parent=5 // pred_fallthru
        _
      %p188 = scmp.le.s32.totalorder 1, %s17
      %p189 = scmp.lt.s32.totalorder %s17, 3
      %p190 = pnand %p188, %p189
      %p191 = pneg %p190
      // Predicated region
      $region29: #{tpu_custom_call.1} parent=5 // pred_check
        _
      $region30: #{tpu_custom_call.1} parent=5 // pred_check_branch
        %193 = sbr.rel (%p190) target = $region32
      $region31: #{tpu_custom_call.1} parent=5 // pred_region
        %s194 = ssub.s32 %s17, 1
        // Predicated region
        $region33: #{tpu_custom_call.1} parent=31 // pred_check
          %p195 = pneg %p50
        $region34: #{tpu_custom_call.1} parent=31 // pred_check_branch
          %197 = sbr.rel (%p195) target = $region36
        $region35: #{tpu_custom_call.1} parent=31 // pred_region
          %198 = dma.done [#allocation5], 16
        $region36: #{tpu_custom_call.1} parent=31 // pred_fallthru
          _
        // Predicated region
        $region37: #{tpu_custom_call.1} parent=31 // pred_check
          %p199 = pneg %p71
        $region38: #{tpu_custom_call.1} parent=31 // pred_check_branch
          %201 = sbr.rel (%p199) target = $region40
        $region39: #{tpu_custom_call.1} parent=31 // pred_region
          %202 = dma.done [#allocation6], 16
        $region40: #{tpu_custom_call.1} parent=31 // pred_fallthru
          _
        %s203 = sand.u32 %s86, 1
        %s204 = scalar_lea.sflag [#allocation3], %s203
        %s205 = sand.u32 %s86, 1
        %s206 = smul.addr %s205, 8
        %s207 = scalar_lea.vmem [#allocation8], %s206
        // Predicated region
        $region41: #{tpu_custom_call.1} parent=31 // pred_check
          %p208 = pneg %p99
        $region42: #{tpu_custom_call.1} parent=31 // pred_check_branch
          %210 = sbr.rel (%p208) target = $region44
        $region43: #{tpu_custom_call.1} parent=31 // pred_region
          %211 = dma.done %s204, 128
        $region44: #{tpu_custom_call.1} parent=31 // pred_fallthru
          _
        %212 = sfence
        %p213 = pneg %p50
        %p214 = pneg %p47
        %p215 = pneg %p71
        %p216 = pneg %p68
        %s217 = sand.u32 %s86, 1
        %s218 = scalar_lea.sflag [#allocation3], %s217
        %s219 = sand.u32 %s86, 1
        %s220 = smul.addr %s219, 8
        %s221 = scalar_lea.vmem [#allocation8], %s220
        %p222 = pneg %p99
        %p223 = pneg %p96
        %p224 = pneg %p127
        %p225 = pneg %p124
        %s226 = sand.u32 %s114, 1
        %s227 = scalar_lea.sflag [#allocation4], %s226
        %s228 = sand.u32 %s114, 1
        %s229 = smul.addr %s228, 4
        %s230 = scalar_lea.vmem [#allocation9], %s229
        %v231 = vld [vmem:[%s207] sm:$0x3]
        %v232 = vld [vmem:[%s207 + $0x2] sm:$0x3]
        %v233 = vld [vmem:[%s207 + $0x4] sm:$0x3]
        %v234 = vld [vmem:[%s207 + $0x6] sm:$0x3]
        %s235 = sld [smem:[#allocation7]]
        %s236 = sld [smem:[#allocation2]]
        %v237 = vstv %s236
        %v238 = vmul.f32 %v237, %v231
        %v239 = vstv %s235
        %v240 = vadd.f32 %v239, %v238
        %s241 = sld [smem:[#allocation2 + $0x1]]
        %v242 = vstv %s241
        %v243 = vmul.f32 %v242, %v232
        %v244 = vadd.f32 %v240, %v243
        %s245 = sld [smem:[#allocation2 + $0x2]]
        %v246 = vstv %s245
        %v247 = vmul.f32 %v246, %v233
        %v248 = vadd.f32 %v244, %v247
        %s249 = sld [smem:[#allocation2 + $0x3]]
        %v250 = vstv %s249
        %v251 = vmul.f32 %v250, %v234
        %v252 = vadd.f32 %v248, %v251
        %v253 = vtanh.pop %v252
        %254 = vst [vmem:[%s230] sm:$0x3] %v253
        %s255 = sld [smem:[#allocation7 + $0x1]]
        %s256 = sld [smem:[#allocation2 + $0x4]]
        %v257 = vstv %s256
        %v258 = vmul.f32 %v257, %v231
        %v259 = vstv %s255
        %v260 = vadd.f32 %v259, %v258
        %s261 = sld [smem:[#allocation2 + $0x5]]
        %v262 = vstv %s261
        %v263 = vmul.f32 %v262, %v232
        %v264 = vadd.f32 %v260, %v263
        %s265 = sld [smem:[#allocation2 + $0x6]]
        %v266 = vstv %s265
        %v267 = vmul.f32 %v266, %v233
        %v268 = vadd.f32 %v264, %v267
        %s269 = sld [smem:[#allocation2 + $0x7]]
        %v270 = vstv %s269
        %v271 = vmul.f32 %v270, %v234
        %v272 = vadd.f32 %v268, %v271
        %v273 = vtanh.pop %v272
        %s274 = scalar_lea.vmem %s230, 2 [#allocation9]
        %275 = vst [vmem:[%s274] sm:$0x3] %v273
        %s276 = sand.u32 %s114, 1
        %s277 = scalar_lea.sflag [#allocation4], %s276
        %s278 = sand.u32 %s114, 1
        %s279 = smul.addr %s278, 4
        %s280 = scalar_lea.vmem [#allocation9], %s279
        // Predicated region
        $region45: #{tpu_custom_call.1} parent=31 // pred_check
          %p281 = pneg %p124
        $region46: #{tpu_custom_call.1} parent=31 // pred_check_branch
          %283 = sbr.rel (%p281) target = $region48
        $region47: #{tpu_custom_call.1} parent=31 // pred_region
          %s285 = ssub.s32 64, 64
          %286 = vsyncadd %s277, %s285
          %s287 = smul.addr %s26, 2
          %s288 = sadd.s32 %s27, %s287
          %s289 = smul.addr %s288, 32
          %s290 = scalar_lea.hbm %s3, %s289
          %s291 = sshll.u32 %s280, 4
          %s292 = int_to_ptr.vmem [resolvable:$true] %s291
          %297 = dma.vmem_to_hbm [thread:$0]  %s292, 64, %s290, %s277, 32, 32, 2
        $region48: #{tpu_custom_call.1} parent=31 // pred_fallthru
          _
      $region32: #{tpu_custom_call.1} parent=5 // pred_fallthru
        _
      %p298 = scmp.le.s32.totalorder 2, %s17
      // Predicated region
      $region49: #{tpu_custom_call.1} parent=5 // pred_check
        %p299 = pneg %p298
      $region50: #{tpu_custom_call.1} parent=5 // pred_check_branch
        %301 = sbr.rel (%p299) target = $region52
      $region51: #{tpu_custom_call.1} parent=5 // pred_region
        %s302 = ssub.s32 %s17, 2
        // Predicated region
        $region53: #{tpu_custom_call.1} parent=51 // pred_check
          %p303 = pneg %p130
        $region54: #{tpu_custom_call.1} parent=51 // pred_check_branch
          %305 = sbr.rel (%p303) target = $region56
        $region55: #{tpu_custom_call.1} parent=51 // pred_region
          %s306 = sand.u32 %s115, 1
          %s307 = scalar_lea.sflag [#allocation4], %s306
          %s308 = sand.u32 %s115, 1
          %s309 = smul.addr %s308, 4
          %s310 = scalar_lea.vmem [#allocation9], %s309
          %311 = dma.done %s307, 64
        $region56: #{tpu_custom_call.1} parent=51 // pred_fallthru
          _
      $region52: #{tpu_custom_call.1} parent=5 // pred_fallthru
        _
    $region6: #{tpu_custom_call.1} parent=1 // loop_footer
      %s21 = sadd.s32 1, %s17
    $region7: #{tpu_custom_call.1} parent=1 // loop_footer_branch
      %16 = sbr.rel target = $region3
    $region8: #{tpu_custom_call.1} parent=1 // loop_exit
      _
    %312 = vsyncpa [#allocation3], 1
    %s313 = scalar_lea.sflag [#allocation3], 1
    %314 = vsyncpa %s313, 1
    %315 = vsyncpa [#allocation4], 1
    %s316 = scalar_lea.sflag [#allocation4], 1
    %317 = vsyncpa %s316, 1
    %318 = vsyncpa [#allocation5], 1
    %s319 = scalar_lea.sflag [#allocation5], 1
    %320 = vsyncpa %s319, 1
    %321 = vsyncpa [#allocation6], 1
    %s322 = scalar_lea.sflag [#allocation6], 1
    %323 = vsyncpa %s322, 1

</llo_original>
